<compile_context>
chip_gen: v7x
topology: tpu7x:2x2x1
jax: 0.10.0
libtpu: 0.0.40
codegen_flags: <defaults>
</compile_context>

<pallas_src>
import functools

import jax
import jax.numpy as jnp
from jax import lax
from jax.experimental import pallas as pl
from jax.experimental.pallas import tpu as pltpu


def _ce_kernel(pred_ref, label_ref, part_ref, m_ref, l_ref, p_ref, *,
               n_total, c_total, tile_n, tile_c):
    """Softmax CE with online logsumexp over class tiles.

    pred_ref:  [TN, TC] logits tile (VMEM)
    label_ref: [TN, 1]  int32 class indices tile (VMEM)
    part_ref:  [1, 1]   f32 per-batch-tile partial sum (SMEM output)
    m_ref/l_ref/p_ref: [TN, 1] f32 VMEM scratch (running max / running sum / picked logit)
    """
    i = pl.program_id(0)          # batch tile (parallel)
    j = pl.program_id(1)          # class tile (sequential reduction axis)

    NEG = jnp.float32(-3.0e38)

    @pl.when(j == 0)
    def _():
        m_ref[...] = jnp.full_like(m_ref, NEG)
        l_ref[...] = jnp.zeros_like(l_ref)
        p_ref[...] = jnp.zeros_like(p_ref)

    lbl = label_ref[...]                                    # [TN, 1] int32
    pred = pred_ref[...].astype(jnp.float32)                # [TN, TC]

    col = j * tile_c + lax.broadcasted_iota(jnp.int32, (tile_n, tile_c), 1)
    col_ok = col < c_total

    # logit of the true class if it falls inside this class tile (0 otherwise)
    p_ref[...] += jnp.sum(jnp.where(col == lbl, pred, 0.0),
                          axis=-1, keepdims=True)

    # online (flash-style) logsumexp across class tiles
    pred_m = jnp.where(col_ok, pred, NEG)                   # mask padded columns
    tile_max = jnp.max(pred_m, axis=-1, keepdims=True)      # [TN, 1]
    m_old = m_ref[...]
    m_new = jnp.maximum(m_old, tile_max)
    l_ref[...] = (l_ref[...] * jnp.exp(m_old - m_new)
                  + jnp.sum(jnp.exp(pred_m - m_new), axis=-1, keepdims=True))
    m_ref[...] = m_new

    @pl.when(j == pl.num_programs(1) - 1)
    def _():
        row = i * tile_n + lax.broadcasted_iota(jnp.int32, (tile_n, 1), 0)
        row_ok = row < n_total
        loss = m_ref[...] + jnp.log(l_ref[...]) - p_ref[...]    # [TN, 1]
        part_ref[0, 0] = jnp.sum(jnp.where(row_ok, loss, 0.0))


def _choose_tiles(n, c, itemsize):
    # Class tile: full C when small, otherwise a lane-aligned 2048-wide slab.
    tile_c = c if c <= 2048 else 2048
    # Batch tile: keep the double-buffered logits tile within ~16 MiB so total
    # VMEM use fits comfortably on every generation (incl. v7x's 64 MiB).
    budget = 16 * 1024 * 1024
    max_tn = max(8, budget // (2 * tile_c * max(itemsize, 1)))
    tile_n = min(n, 1024, max_tn)
    if tile_n < n:
        tile_n = max(8, (tile_n // 8) * 8)   # sublane alignment for partial grids
    return tile_n, tile_c


def cross_entropy_loss(cls_score, label, *, loss_weight=1.0,
                       tile_n=None, tile_c=None):
    """Pallas implementation of CrossEntropyLoss().forward(cls_score, label).

    cls_score: [N, C] float logits
    label:     [N]    int class indices
    returns:   scalar f32 loss (mean over batch, scaled by loss_weight)
    """
    n, c = cls_score.shape
    itemsize = jnp.dtype(cls_score.dtype).itemsize
    auto_tn, auto_tc = _choose_tiles(n, c, itemsize)
    tile_n = auto_tn if tile_n is None else tile_n
    tile_c = auto_tc if tile_c is None else tile_c

    n_tiles = pl.cdiv(n, tile_n)
    c_tiles = pl.cdiv(c, tile_c)

    label2d = label.astype(jnp.int32).reshape(n, 1)

    kernel = functools.partial(_ce_kernel, n_total=n, c_total=c,
                               tile_n=tile_n, tile_c=tile_c)

    vmem_bytes = (2 * tile_n * tile_c * itemsize      # double-buffered logits
                  + 2 * tile_n * 4                    # double-buffered labels
                  + 3 * tile_n * 128 * 4              # padded f32 scratch
                  + (4 << 20))                        # headroom
    vmem_bytes = int(min(vmem_bytes, 56 * 1024 * 1024))

    partials = pl.pallas_call(
        kernel,
        out_shape=jax.ShapeDtypeStruct((n_tiles, 1), jnp.float32),
        grid_spec=pltpu.PrefetchScalarGridSpec(
            num_scalar_prefetch=0,
            grid=(n_tiles, c_tiles),
            in_specs=[
                pl.BlockSpec((tile_n, tile_c), lambda i, j: (i, j)),
                pl.BlockSpec((tile_n, 1), lambda i, j: (i, 0)),
            ],
            out_specs=pl.BlockSpec((1, 1), lambda i, j: (i, 0),
                                   memory_space=pltpu.SMEM),
            scratch_shapes=[pltpu.VMEM((tile_n, 1), jnp.float32)] * 3,
        ),
        compiler_params=pltpu.CompilerParams(
            dimension_semantics=("parallel", "arbitrary"),
            vmem_limit_bytes=vmem_bytes,
        ),
        cost_estimate=pl.CostEstimate(
            flops=6 * n * c,
            transcendentals=n * c,
            bytes_accessed=n * c * itemsize + n * 4 + n_tiles * 4,
        ),
    )(cls_score, label2d)

    # reduction='mean' over the batch then * loss_weight (done outside the kernel
    # so the batch grid axis can stay 'parallel' for megacore).
    return jnp.sum(partials) * jnp.float32(loss_weight / n)


def _reference(cls_score, label, loss_weight=1.0):
    """Pure-JAX reference matching F.cross_entropy(..., reduction='none').mean()."""
    logp = jax.nn.log_softmax(cls_score.astype(jnp.float32), axis=-1)
    per_sample = -jnp.take_along_axis(
        logp, label[:, None].astype(jnp.int32), axis=-1)[:, 0]
    return loss_weight * per_sample.mean()


if __name__ == "__main__":
    key = jax.random.PRNGKey(0)
    k1, k2, k3, k4 = jax.random.split(key, 4)

    # Primary small test matching the module's default forward path.
    N, C = 8, 32
    cls_score = jax.random.normal(k1, (N, C), dtype=jnp.float32)
    label = jax.random.randint(k2, (N,), 0, C, dtype=jnp.int32)
    loss = jax.block_until_ready(cross_entropy_loss(cls_score, label,
                                                    loss_weight=1.0))
    ref = _reference(cls_score, label, 1.0)
    assert jnp.allclose(loss, ref, rtol=1e-5, atol=1e-5), (loss, ref)

    # Secondary check exercising the multi-tile / padded (N, C not divisible) path.
    N2, C2 = 20, 160
    cls2 = jax.random.normal(k3, (N2, C2), dtype=jnp.float32)
    lbl2 = jax.random.randint(k4, (N2,), 0, C2, dtype=jnp.int32)
    loss2 = jax.block_until_ready(
        cross_entropy_loss(cls2, lbl2, loss_weight=0.5, tile_n=8, tile_c=128))
    ref2 = _reference(cls2, lbl2, 0.5)
    assert jnp.allclose(loss2, ref2, rtol=1e-5, atol=1e-5), (loss2, ref2)

    print("KERNEL_OK")
</pallas_src>

<mosaic_0001>
module attributes {stable_mosaic.version = 11 : i64} {
  func.func @_ce_kernel(%arg0: i32, %arg1: i32, %arg2: memref<8x32xf32, #tpu.memory_space<vmem>>, %arg3: memref<8x1xi32, #tpu.memory_space<vmem>>, %arg4: memref<1x1xf32, #tpu.memory_space<smem>>, %arg5: memref<8x1xf32, #tpu.memory_space<vmem>>, %arg6: memref<8x1xf32, #tpu.memory_space<vmem>>, %arg7: memref<8x1xf32, #tpu.memory_space<vmem>>) attributes {dimension_semantics = [#tpu.dimension_semantics<parallel>, #tpu.dimension_semantics<arbitrary>], iteration_bounds = array<i64: 1, 1>, scalar_prefetch = 0 : i64, scratch_operands = 3 : i64, tpu.core_type = #tpu.core_type<tc>, window_params = [{transform_indices = @transform_0, window_bounds = array<i64: 8, 32>}, {transform_indices = @transform_1, window_bounds = array<i64: 8, 1>}, {transform_indices = @transform_2, window_bounds = array<i64: 1, 1>}]} {
    %c0_i32 = arith.constant 0 : i32
    %0 = arith.cmpi eq, %arg1, %c0_i32 : i32
    %1 = arith.extui %0 : i1 to i32
    %cst = arith.constant -3.000000e+38 : f32
    %c0_i32_0 = arith.constant 0 : i32
    %2 = arith.cmpi ne, %1, %c0_i32_0 : i32
    scf.if %2 {
      %41 = vector.broadcast %cst : f32 to vector<8x1xf32>
      %c0_24 = arith.constant 0 : index
      %c0_25 = arith.constant 0 : index
      %42 = vector.load %arg5[%c0_24, %c0_25] : memref<8x1xf32, #tpu.memory_space<vmem>>, vector<8x1xf32>
      tpu.vector_store %arg5[%c0_24, %c0_25], %41 {strides = array<i32>} : memref<8x1xf32, #tpu.memory_space<vmem>>, vector<8x1xf32>,
      %cst_26 = arith.constant 0.000000e+00 : f32
      %43 = vector.broadcast %cst_26 : f32 to vector<8x1xf32>
      %c0_27 = arith.constant 0 : index
      %c0_28 = arith.constant 0 : index
      %44 = vector.load %arg6[%c0_27, %c0_28] : memref<8x1xf32, #tpu.memory_space<vmem>>, vector<8x1xf32>
      tpu.vector_store %arg6[%c0_27, %c0_28], %43 {strides = array<i32>} : memref<8x1xf32, #tpu.memory_space<vmem>>, vector<8x1xf32>,
      %cst_29 = arith.constant 0.000000e+00 : f32
      %45 = vector.broadcast %cst_29 : f32 to vector<8x1xf32>
      %c0_30 = arith.constant 0 : index
      %c0_31 = arith.constant 0 : index
      %46 = vector.load %arg7[%c0_30, %c0_31] : memref<8x1xf32, #tpu.memory_space<vmem>>, vector<8x1xf32>
      tpu.vector_store %arg7[%c0_30, %c0_31], %45 {strides = array<i32>} : memref<8x1xf32, #tpu.memory_space<vmem>>, vector<8x1xf32>,
    } else {
    }
    %c0 = arith.constant 0 : index
    %c0_1 = arith.constant 0 : index
    %3 = vector.load %arg3[%c0, %c0_1] : memref<8x1xi32, #tpu.memory_space<vmem>>, vector<8x1xi32>
    %c0_2 = arith.constant 0 : index
    %c0_3 = arith.constant 0 : index
    %4 = vector.load %arg2[%c0_2, %c0_3] : memref<8x32xf32, #tpu.memory_space<vmem>>, vector<8x32xf32>
    %c32_i32 = arith.constant 32 : i32
    %5 = arith.muli %arg1, %c32_i32 : i32
    %6 = tpu.iota {dimensions = array<i32: 1>} : vector<8x32xi32>
    %7 = vector.broadcast %5 : i32 to vector<8x32xi32>
    %8 = arith.addi %7, %6 : vector<8x32xi32>
    %c32_i32_4 = arith.constant 32 : i32
    %9 = vector.broadcast %c32_i32_4 : i32 to vector<8x32xi32>
    %10 = arith.cmpi slt, %8, %9 : vector<8x32xi32>
    %c0_5 = arith.constant 0 : index
    %c0_6 = arith.constant 0 : index
    %11 = vector.load %arg7[%c0_5, %c0_6] : memref<8x1xf32, #tpu.memory_space<vmem>>, vector<8x1xf32>
    %12 = vector.broadcast %3 : vector<8x1xi32> to vector<8x32xi32>
    %13 = arith.cmpi eq, %8, %12 : vector<8x32xi32>
    %cst_7 = arith.constant 0.000000e+00 : f32
    %14 = vector.broadcast %cst_7 : f32 to vector<8x32xf32>
    %15 = arith.select %13, %4, %14 : vector<8x32xi1>, vector<8x32xf32>
    %cst_8 = arith.constant dense<0.000000e+00> : vector<8xf32>
    %16 = vector.multi_reduction <add>, %15, %cst_8 [1] : vector<8x32xf32> to vector<8xf32>
    %17 = vector.shape_cast %16 : vector<8xf32> to vector<8x1xf32>
    %18 = arith.addf %11, %17 : vector<8x1xf32>
    %c0_9 = arith.constant 0 : index
    %c0_10 = arith.constant 0 : index
    %19 = vector.load %arg7[%c0_9, %c0_10] : memref<8x1xf32, #tpu.memory_space<vmem>>, vector<8x1xf32>
    tpu.vector_store %arg7[%c0_9, %c0_10], %18 {strides = array<i32>} : memref<8x1xf32, #tpu.memory_space<vmem>>, vector<8x1xf32>,
    %cst_11 = arith.constant -3.000000e+38 : f32
    %20 = vector.broadcast %cst_11 : f32 to vector<8x32xf32>
    %21 = arith.select %10, %4, %20 : vector<8x32xi1>, vector<8x32xf32>
    %cst_12 = arith.constant dense<0xFF800000> : vector<8xf32>
    %22 = vector.multi_reduction <maximumf>, %21, %cst_12 [1] : vector<8x32xf32> to vector<8xf32>
    %23 = vector.shape_cast %22 : vector<8xf32> to vector<8x1xf32>
    %c0_13 = arith.constant 0 : index
    %c0_14 = arith.constant 0 : index
    %24 = vector.load %arg5[%c0_13, %c0_14] : memref<8x1xf32, #tpu.memory_space<vmem>>, vector<8x1xf32>
    %25 = arith.maximumf %24, %23 : vector<8x1xf32>
    %c0_15 = arith.constant 0 : index
    %c0_16 = arith.constant 0 : index
    %26 = vector.load %arg6[%c0_15, %c0_16] : memref<8x1xf32, #tpu.memory_space<vmem>>, vector<8x1xf32>
    %27 = arith.subf %24, %25 : vector<8x1xf32>
    %28 = math.exp %27 : vector<8x1xf32>
    %29 = arith.mulf %26, %28 : vector<8x1xf32>
    %30 = vector.broadcast %25 : vector<8x1xf32> to vector<8x32xf32>
    %31 = arith.subf %21, %30 : vector<8x32xf32>
    %32 = math.exp %31 : vector<8x32xf32>
    %cst_17 = arith.constant dense<0.000000e+00> : vector<8xf32>
    %33 = vector.multi_reduction <add>, %32, %cst_17 [1] : vector<8x32xf32> to vector<8xf32>
    %34 = vector.shape_cast %33 : vector<8xf32> to vector<8x1xf32>
    %35 = arith.addf %29, %34 : vector<8x1xf32>
    %c0_18 = arith.constant 0 : index
    %c0_19 = arith.constant 0 : index
    %36 = vector.load %arg6[%c0_18, %c0_19] : memref<8x1xf32, #tpu.memory_space<vmem>>, vector<8x1xf32>
    tpu.vector_store %arg6[%c0_18, %c0_19], %35 {strides = array<i32>} : memref<8x1xf32, #tpu.memory_space<vmem>>, vector<8x1xf32>,
    %c0_20 = arith.constant 0 : index
    %c0_21 = arith.constant 0 : index
    %37 = vector.load %arg5[%c0_20, %c0_21] : memref<8x1xf32, #tpu.memory_space<vmem>>, vector<8x1xf32>
    tpu.vector_store %arg5[%c0_20, %c0_21], %25 {strides = array<i32>} : memref<8x1xf32, #tpu.memory_space<vmem>>, vector<8x1xf32>,
    %c0_i32_22 = arith.constant 0 : i32
    %38 = arith.cmpi eq, %arg1, %c0_i32_22 : i32
    %39 = arith.extui %38 : i1 to i32
    %c0_i32_23 = arith.constant 0 : i32
    %40 = arith.cmpi ne, %39, %c0_i32_23 : i32
    scf.if %40 {
      %c8_i32 = arith.constant 8 : i32
      %41 = arith.muli %arg0, %c8_i32 : i32
      %42 = tpu.iota {dimensions = array<i32: 0>} : vector<8x1xi32>
      %43 = vector.broadcast %41 : i32 to vector<8x1xi32>
      %44 = arith.addi %43, %42 : vector<8x1xi32>
      %c8_i32_24 = arith.constant 8 : i32
      %45 = vector.broadcast %c8_i32_24 : i32 to vector<8x1xi32>
      %46 = arith.cmpi slt, %44, %45 : vector<8x1xi32>
      %c0_25 = arith.constant 0 : index
      %c0_26 = arith.constant 0 : index
      %47 = vector.load %arg5[%c0_25, %c0_26] : memref<8x1xf32, #tpu.memory_space<vmem>>, vector<8x1xf32>
      %c0_27 = arith.constant 0 : index
      %c0_28 = arith.constant 0 : index
      %48 = vector.load %arg6[%c0_27, %c0_28] : memref<8x1xf32, #tpu.memory_space<vmem>>, vector<8x1xf32>
      %49 = math.log %48 : vector<8x1xf32>
      %50 = arith.addf %47, %49 : vector<8x1xf32>
      %c0_29 = arith.constant 0 : index
      %c0_30 = arith.constant 0 : index
      %51 = vector.load %arg7[%c0_29, %c0_30] : memref<8x1xf32, #tpu.memory_space<vmem>>, vector<8x1xf32>
      %52 = arith.subf %50, %51 : vector<8x1xf32>
      %cst_31 = arith.constant 0.000000e+00 : f32
      %53 = vector.broadcast %cst_31 : f32 to vector<8x1xf32>
      %54 = arith.select %46, %52, %53 : vector<8x1xi1>, vector<8x1xf32>
      %55 = vector.shape_cast %54 : vector<8x1xf32> to vector<1x8x1xf32>
      %cst_32 = arith.constant dense<0.000000e+00> : vector<1xf32>
      %56 = vector.multi_reduction <add>, %55, %cst_32 [1, 2] : vector<1x8x1xf32> to vector<1xf32>
      %57 = vector.shape_cast %56 : vector<1xf32> to vector<1x1x1xf32>
      %58 = vector.extract %57[0, 0, 0] : f32 from vector<1x1x1xf32>
      %c0_33 = arith.constant 0 : index
      %c0_34 = arith.constant 0 : index
      %59 = memref.load %arg4[%c0_33, %c0_34] : memref<1x1xf32, #tpu.memory_space<smem>>
      memref.store %58, %arg4[%c0_33, %c0_34] : memref<1x1xf32, #tpu.memory_space<smem>>
    } else {
    }
    return
  }
  func.func @transform_0(%arg0: i32, %arg1: i32) -> (i32, i32) {
    %c0_i32 = arith.constant 0 : i32
    return %arg0, %arg1 : i32, i32
  }
  func.func @transform_1(%arg0: i32, %arg1: i32) -> (i32, i32) {
    %c0_i32 = arith.constant 0 : i32
    %c0_i32_0 = arith.constant 0 : i32
    return %arg0, %c0_i32 : i32, i32
  }
  func.func @transform_2(%arg0: i32, %arg1: i32) -> (i32, i32) {
    %c0_i32 = arith.constant 0 : i32
    %c0_i32_0 = arith.constant 0 : i32
    return %arg0, %c0_i32 : i32, i32
  }
}

</mosaic_0001>

<llo_original>
// kernel: tpu_custom_call.1
$region0: #{tpu_custom_call.1}
  #allocation0 [shape = 'u32[]', space=smem, size = 0x4, offset = 0x4, fixed_abs, tag = 'smem constant byte address 0x4 - core index']
  #allocation1 [shape = 'u32[144,128]{1,0:T(1,128)}', space=vmem, size = 0x12000, scoped, tag = 'internal scratch']
  #allocation2 [shape = 'f32[8,1]{1,0:T(8,128)}', space=vmem, size = 0x1000, scoped, tag = 'scratch operand']
  #allocation3 [shape = 'f32[8,1]{1,0:T(8,128)}', space=vmem, size = 0x1000, scoped, tag = 'scratch operand']
  #allocation4 [shape = 'f32[8,1]{1,0:T(8,128)}', space=vmem, size = 0x1000, scoped, tag = 'scratch operand']
  %s0 = inlined_call_operand.vmem [shape: f32[8,32], index: 0, kind: input, shape index: {}]
  %s1 = inlined_call_operand.vmem [shape: s32[8,1], index: 1, kind: input, shape index: {}]
  %s2 = inlined_call_operand.hbm [shape: f32[1,1], index: 2, kind: output, shape index: {}]
  %s3 = sld [smem:[#allocation0]]
  $region26: #{tpu_custom_call.1} parent=0
    _
  %s5 = ssub.s32 1, %s3
  %s6 = scalar_select 0, %s5, %s3
  $region1: #{tpu_custom_call.1} parent=0
    #allocation5 [shape = 'u8[512]{0}', space=smem, size = 0x200, scoped, tag = 'output window, operand 0, single buffered']
    #allocation6 [shape = 's32[1]{0}', space=sflag, size = 0x4, scoped, tag = 'scoped memory for tpu_custom_call.1']
    %7 = vsyncpa [#allocation6], 0
    // Predicated region
    $region2: #{tpu_custom_call.1} parent=1 // pred_check
      _
    $region3: #{tpu_custom_call.1} parent=1 // pred_check_branch
      %9 = sbr.rel (0) target = $region5
    $region4: #{tpu_custom_call.1} parent=1 // pred_region
      _
    $region5: #{tpu_custom_call.1} parent=1 // pred_fallthru
      _
    // Predicated region
    $region6: #{tpu_custom_call.1} parent=1 // pred_check
      _
    $region7: #{tpu_custom_call.1} parent=1 // pred_check_branch
      %11 = sbr.rel (0) target = $region9
    $region8: #{tpu_custom_call.1} parent=1 // pred_region
      _
    $region9: #{tpu_custom_call.1} parent=1 // pred_fallthru
      _
    %p12 = scmp.eq.s32.totalorder 0, 0
    // Predicated region
    $region10: #{tpu_custom_call.1} parent=1 // pred_check
      %p13 = pneg %p12
    $region11: #{tpu_custom_call.1} parent=1 // pred_check_branch
      %15 = sbr.rel (%p13) target = $region13
    $region12: #{tpu_custom_call.1} parent=1 // pred_region
      %vm16 = vcmask 7168
      %17 = vst.msk [vmem:[#allocation2] sm:$0xff] %vm16, -3e+38
      %18 = vst.msk [vmem:[#allocation3] sm:$0xff] %vm16, 0.0
      %19 = vst.msk [vmem:[#allocation4] sm:$0xff] %vm16, 0.0
    $region13: #{tpu_custom_call.1} parent=1 // pred_fallthru
      _
    %v20 = vld [vmem:[%s1] sm:$0xff]
    %v21 = vld [vmem:[%s0] sm:$0xff]
    %s22 = smul.u32 0, 32
    %v23 = vlaneseq
    %v24 = vand.u32 %v23, 127
    %v25 = vstv %s22
    %v26 = vadd.s32 %v25, %v24
    %vm27 = vcmp.lt.s32.totalorder %v26, 32
    %v28 = vld [vmem:[#allocation4] sm:$0xff]
    %29 = vset.pattern.permute.xlu0 0
    %30 = vperm.xlu0 %29, %v20
    %v31 = vpop.permute.xlu0 %30
    %vm32 = vcmp.eq.s32.totalorder %v26, %v31
    %v33 = vsel %vm32, %v21, 0.0
    %vm34 = vcmask 261120
    %v35 = vsel %vm34, %v33, 0.0
    %36 = vadd.xlane.f32.xlu0 %v35
    %v37 = vpop.xlane.xlu0 %36
    %v38 = vadd.f32 %v28, %v37
    %vm39 = vcmask 7168
    %40 = vst.msk [vmem:[#allocation4] sm:$0xff] %vm39, %v38
    %v41 = vsel %vm27, %v21, -3e+38
    %v42 = vsel %vm34, %v41, -inf
    %43 = vmax.xlane.f32.xlu0 %v42
    %v44 = vpop.xlane.xlu0 %43
    %v45 = vld [vmem:[#allocation2] sm:$0xff]
    %v46 = vmax.f32 %v45, %v44
    %v47 = vld [vmem:[#allocation3] sm:$0xff]
    %v48 = vsub.f32 %v45, %v46
    %v49 = vmul.f32 %v48, 1.442695
    %v50 = vpow.pop %v49
    %v51 = vmul.f32 %v47, %v50
    %53 = vset.pattern.permute.xlu0 0
    %54 = vperm.xlu0 %53, %v46
    %v55 = vpop.permute.xlu0 %54
    %v57 = vsub.f32 %v41, %v55
    %v58 = vmul.f32 %v57, 1.442695
    %v59 = vpow.pop %v58
    %v60 = vsel %vm34, %v59, 0.0
    %61 = vadd.xlane.f32.xlu0 %v60
    %v62 = vpop.xlane.xlu0 %61
    %v63 = vadd.f32 %v51, %v62
    %64 = vst.msk [vmem:[#allocation3] sm:$0xff] %vm39, %v63
    %65 = vst.msk [vmem:[#allocation2] sm:$0xff] %vm39, %v46
    // Predicated region
    $region14: #{tpu_custom_call.1} parent=1 // pred_check
      %p66 = pneg %p12
    $region15: #{tpu_custom_call.1} parent=1 // pred_check_branch
      %68 = sbr.rel (%p66) target = $region17
    $region16: #{tpu_custom_call.1} parent=1 // pred_region
      %s69 = smul.u32 0, 8
      %v70 = vlaneseq
      %v71 = vshrl.u32 %v70, 7
      %v72 = vstv %s69
      %v73 = vadd.s32 %v72, %v71
      %vm74 = vcmp.lt.s32.totalorder %v73, 8
      %v75 = vld [vmem:[#allocation2] sm:$0xff]
      %v76 = vld [vmem:[#allocation3] sm:$0xff]
      %v77 = vlog2.pop %v76
      %v78 = vmul.f32 %v77, 0.6931472
      %v79 = vadd.f32 %v75, %v78
      %v80 = vld [vmem:[#allocation4] sm:$0xff]
      %v81 = vsub.f32 %v79, %v80
      %v82 = vsel %vm74, %v81, 0.0
      %v83 = vsel %vm39, %v82, 0.0
      %84 = vadd.xlane.f32.xlu0 %v83
      %v85 = vpop.xlane.xlu0 %84
      %v86 = vrot.slane %v85, 4
      %v87 = vadd.f32 %v85, %v86
      %v88 = vrot.slane %v87, 2
      %v89 = vadd.f32 %v87, %v88
      %v90 = vrot.slane %v89, 1
      %v91 = vadd.f32 %v89, %v90
      %s92 = vtos %v91
      %s93 = scalar_lea.smem [#allocation5], 0
      %94 = sst [smem:[%s93]] %s92
    $region17: #{tpu_custom_call.1} parent=1 // pred_fallthru
      _
    // Predicated region
    $region18: #{tpu_custom_call.1} parent=1 // pred_check
      _
    $region19: #{tpu_custom_call.1} parent=1 // pred_check_branch
      %96 = sbr.rel (0) target = $region21
    $region20: #{tpu_custom_call.1} parent=1 // pred_region
      %s98 = ssub.s32 16, 16
      %99 = vsyncadd [#allocation6], %s98
      %102 = dma.smem_to_hbm [#allocation5], 16, %s2, [#allocation6]
    $region21: #{tpu_custom_call.1} parent=1 // pred_fallthru
      _
    // Predicated region
    $region22: #{tpu_custom_call.1} parent=1 // pred_check
      _
    $region23: #{tpu_custom_call.1} parent=1 // pred_check_branch
      %104 = sbr.rel (0) target = $region25
    $region24: #{tpu_custom_call.1} parent=1 // pred_region
      %105 = dma.done [#allocation6], 16
    $region25: #{tpu_custom_call.1} parent=1 // pred_fallthru
      _
    %106 = sfence
    %107 = vsyncpa [#allocation6], 1

</llo_original>
